<compile_context>
chip_gen: v6e
topology: v6e:2x2x1
jax: 0.10.0
libtpu: 0.0.40
codegen_flags: <defaults>
</compile_context>

<pallas_src>
import functools
import math

import jax
import jax.numpy as jnp
from jax.experimental import pallas as pl
from jax.experimental.pallas import tpu as pltpu

KERNEL_SIZE = 49
STRIDE = 1                       # module default; only stride=1 is implemented
HALO = 128                       # lane-aligned halo block width (>= KERNEL_SIZE - 1)
PAD_LEFT = (KERNEL_SIZE - 1) // 2

assert KERNEL_SIZE - 1 <= HALO, "halo block must cover the full filter support"


def make_weight(kernel_size: int = KERNEL_SIZE, dtype=jnp.float32) -> jnp.ndarray:
    """Deterministic filter, exactly as the module builds it (conv_sin)."""
    t = jnp.linspace(-math.pi / 2, math.pi / 2, kernel_size, dtype=dtype)
    mean = jnp.mean(t)
    var = jnp.mean((t - mean) ** 2)              # InstanceNorm uses biased variance
    aff_t = (t - mean) / jnp.sqrt(var + 1e-5)    # gamma=1, beta=0 at init
    return jnp.sin(aff_t)                        # op = torch.sin


def _round_up(a: int, b: int) -> int:
    return (a + b - 1) // b * b


def _make_band_matrices(w: jnp.ndarray, tl: int, halo: int):
    """Banded Toeplitz operators so that conv == x_main @ W0 + x_halo @ W1.

    out[i] = sum_k w[k] * xpad[i + k]   (cross-correlation, torch.conv1d)
    W0[m, i] = w[m - i]        for 0 <= m - i < K         (main TL-wide block)
    W1[m, i] = w[m + tl - i]   for 0 <= m + tl - i < K    (halo block, next TL cols)
    """
    K = w.shape[0]
    w = w.astype(jnp.float32)
    m = jnp.arange(tl)[:, None]
    i = jnp.arange(tl)[None, :]
    k0 = m - i
    w0 = jnp.where((k0 >= 0) & (k0 < K), w[jnp.clip(k0, 0, K - 1)], 0.0)
    mh = jnp.arange(halo)[:, None]
    k1 = mh + tl - i
    w1 = jnp.where((k1 >= 0) & (k1 < K), w[jnp.clip(k1, 0, K - 1)], 0.0)
    return w0, w1


@functools.lru_cache(maxsize=None)
def _cached_band_bf16(tl: int, halo: int, kernel_size: int):
    """Band matrices for the deterministic conv_sin filter, built once per tiling."""
    w0, w1 = _make_band_matrices(make_weight(kernel_size), tl, halo)
    return w0.astype(jnp.bfloat16), w1.astype(jnp.bfloat16)


def _conv_band_kernel(x_main_ref, x_halo_ref, w0_ref, w1_ref, o_ref):
    # x_main_ref: (R_TILE, TL)    bf16, current L tile of the padded input
    # x_halo_ref: (R_TILE, HALO)  bf16, next 128 columns (covers the K-1 = 48 halo)
    # w0_ref:     (TL, TL)        bf16 banded Toeplitz taps (resident across grid)
    # w1_ref:     (HALO, TL)      bf16
    # o_ref:      (R_TILE, TL)    f32
    acc = jnp.dot(x_main_ref[...], w0_ref[...], preferred_element_type=jnp.float32)
    acc = acc + jnp.dot(x_halo_ref[...], w1_ref[...], preferred_element_type=jnp.float32)
    o_ref[...] = acc.astype(o_ref.dtype)


@functools.partial(jax.jit, static_argnames=("tl", "r_tile"))
def _conv_band_call(x, w0, w1, *, tl: int, r_tile: int):
    B, L, C = x.shape
    R = B * C
    L_pad = _round_up(L, tl)
    R_pad = _round_up(R, r_tile)
    W_xp = L_pad + HALO                          # padded input width
    halo_blocks = tl // HALO                     # halo block index stride

    # (B, L, C) -> (B*C, L), cast to bf16, zero-pad: 24 'same'-conv columns on the
    # left, zeros on the right up to L_pad + HALO, rows up to a multiple of r_tile.
    # Under jit this all fuses into a single HBM read/write pass.
    x_flat = jnp.transpose(x, (0, 2, 1)).reshape(R, L).astype(jnp.bfloat16)
    xp = jnp.pad(x_flat, ((0, R_pad - R), (PAD_LEFT, W_xp - PAD_LEFT - L)))

    out_flat = pl.pallas_call(
        _conv_band_kernel,
        out_shape=jax.ShapeDtypeStruct((R_pad, L_pad), jnp.float32),
        grid=(R_pad // r_tile, L_pad // tl),
        in_specs=[
            # main L tile of the padded input
            pl.BlockSpec((r_tile, tl), lambda r, j: (r, j)),
            # 128-wide lane-aligned halo block starting right after the main tile
            pl.BlockSpec((r_tile, HALO), lambda r, j: (r, (j + 1) * halo_blocks)),
            # banded Toeplitz weights (constant block index -> fetched once, resident)
            pl.BlockSpec((tl, tl), lambda r, j: (0, 0)),
            pl.BlockSpec((HALO, tl), lambda r, j: (0, 0)),
        ],
        out_specs=pl.BlockSpec((r_tile, tl), lambda r, j: (r, j)),
        compiler_params=pltpu.CompilerParams(
            dimension_semantics=("parallel", "parallel"),
            vmem_limit_bytes=32 * 1024 * 1024),
    )(xp, xp, w0, w1)

    # Slice/reshape/transpose back to (B, L, C); fuses into one pass under jit.
    out = out_flat[:R, :L].reshape(B, C, L)
    return jnp.transpose(out, (0, 2, 1)).astype(x.dtype)


def convolutional_operator(x: jnp.ndarray, weight: jnp.ndarray | None = None,
                           *, l_tile: int = 512, r_tile_max: int = 1024) -> jnp.ndarray:
    """x: (B, L, C) float32. weight: (K,) or None (use the module's conv_sin filter)."""
    assert STRIDE == 1, "only stride=1 (the module default) is implemented"
    B, L, C = x.shape
    tl = min(l_tile, _round_up(L, 128))          # lane tile (multiple of 128)
    r_tile = min(r_tile_max, _round_up(B * C, 16))  # sublane tile (bf16-friendly)

    if weight is None:
        w0, w1 = _cached_band_bf16(tl, HALO, KERNEL_SIZE)
    else:
        w0f, w1f = _make_band_matrices(weight, tl, HALO)
        w0, w1 = w0f.astype(jnp.bfloat16), w1f.astype(jnp.bfloat16)

    return _conv_band_call(x, w0, w1, tl=tl, r_tile=r_tile)


def _reference(x: jnp.ndarray, weight: jnp.ndarray) -> jnp.ndarray:
    """Pure-JAX reference (depthwise conv1d, groups=C), f32."""
    B, L, C = x.shape
    pad = (KERNEL_SIZE - 1) // 2
    x_ncl = jnp.transpose(x, (0, 2, 1))
    rhs = jnp.broadcast_to(weight.reshape(1, 1, KERNEL_SIZE), (C, 1, KERNEL_SIZE))
    out = jax.lax.conv_general_dilated(
        x_ncl, rhs,
        window_strides=(STRIDE,),
        padding=[(pad, pad)],
        dimension_numbers=("NCH", "OIH", "NCH"),
        feature_group_count=C,
    )
    return jnp.transpose(out, (0, 2, 1))


if __name__ == "__main__":
    key = jax.random.PRNGKey(0)
    weight = make_weight()

    # Small shapes consistent with the module's "b l c" input; the second/third
    # cases exercise non-aligned (padded) row/length paths.
    for (B, L, C) in [(2, 128, 4), (2, 200, 3), (4, 300, 8)]:
        key, sub = jax.random.split(key)
        x = jax.random.normal(sub, (B, L, C), dtype=jnp.float32)

        out = jax.block_until_ready(convolutional_operator(x))
        ref = _reference(x, weight)

        assert out.shape == (B, L, C)
        err = float(jnp.max(jnp.abs(out - ref)))
        # bf16-streamed operands (equivalent to the MXU's default bf16-pass
        # truncation) vs an f32 reference: errors are O(1e-2); an indexing or
        # orientation bug would show up as O(1) errors.
        assert err < 1e-1, f"mismatch vs reference conv1d: max abs err = {err}"

    print("KERNEL_OK")
</pallas_src>

<mosaic_0001>
module attributes {stable_mosaic.version = 11 : i64} {
  func.func @_conv_band_kernel(%arg0: i32, %arg1: i32, %arg2: memref<16x128xbf16, #tpu.memory_space<vmem>>, %arg3: memref<16x128xbf16, #tpu.memory_space<vmem>>, %arg4: memref<128x128xbf16, #tpu.memory_space<vmem>>, %arg5: memref<128x128xbf16, #tpu.memory_space<vmem>>, %arg6: memref<16x128xf32, #tpu.memory_space<vmem>>) attributes {dimension_semantics = [#tpu.dimension_semantics<parallel>, #tpu.dimension_semantics<parallel>], iteration_bounds = array<i64: 1, 1>, scalar_prefetch = 0 : i64, scratch_operands = 0 : i64, tpu.core_type = #tpu.core_type<tc>, window_params = [{transform_indices = @transform_0, window_bounds = array<i64: 16, 128>}, {transform_indices = @transform_1, window_bounds = array<i64: 16, 128>}, {pipeline_mode = #tpu.pipeline_mode<synchronous>, transform_indices = @transform_2, window_bounds = array<i64: 128, 128>}, {pipeline_mode = #tpu.pipeline_mode<synchronous>, transform_indices = @transform_3, window_bounds = array<i64: 128, 128>}, {transform_indices = @transform_4, window_bounds = array<i64: 16, 128>}]} {
    %c0 = arith.constant 0 : index
    %c0_0 = arith.constant 0 : index
    %0 = vector.load %arg2[%c0, %c0_0] : memref<16x128xbf16, #tpu.memory_space<vmem>>, vector<16x128xbf16>
    %c0_1 = arith.constant 0 : index
    %c0_2 = arith.constant 0 : index
    %1 = vector.load %arg4[%c0_1, %c0_2] : memref<128x128xbf16, #tpu.memory_space<vmem>>, vector<128x128xbf16>
    %cst = arith.constant dense<0.000000e+00> : vector<16x128xf32>
    %2 = tpu.matmul %0, %1, %cst {dimension_numbers = #tpu.dot_dimension_numbers<[1], [0], [0], [1], [0, 0, 1, 1], [], []>} : vector<16x128xbf16>, vector<128x128xbf16>, vector<16x128xf32> -> vector<16x128xf32>
    %c0_3 = arith.constant 0 : index
    %c0_4 = arith.constant 0 : index
    %3 = vector.load %arg3[%c0_3, %c0_4] : memref<16x128xbf16, #tpu.memory_space<vmem>>, vector<16x128xbf16>
    %c0_5 = arith.constant 0 : index
    %c0_6 = arith.constant 0 : index
    %4 = vector.load %arg5[%c0_5, %c0_6] : memref<128x128xbf16, #tpu.memory_space<vmem>>, vector<128x128xbf16>
    %cst_7 = arith.constant dense<0.000000e+00> : vector<16x128xf32>
    %5 = tpu.matmul %3, %4, %cst_7 {dimension_numbers = #tpu.dot_dimension_numbers<[1], [0], [0], [1], [0, 0, 1, 1], [], []>} : vector<16x128xbf16>, vector<128x128xbf16>, vector<16x128xf32> -> vector<16x128xf32>
    %6 = arith.addf %2, %5 : vector<16x128xf32>
    %c0_8 = arith.constant 0 : index
    %c0_9 = arith.constant 0 : index
    %7 = vector.load %arg6[%c0_8, %c0_9] : memref<16x128xf32, #tpu.memory_space<vmem>>, vector<16x128xf32>
    tpu.vector_store %arg6[%c0_8, %c0_9], %6 {strides = array<i32>} : memref<16x128xf32, #tpu.memory_space<vmem>>, vector<16x128xf32>,
    return
  }
  func.func @transform_0(%arg0: i32, %arg1: i32) -> (i32, i32) {
    %c0_i32 = arith.constant 0 : i32
    return %arg0, %arg1 : i32, i32
  }
  func.func @transform_1(%arg0: i32, %arg1: i32) -> (i32, i32) {
    %c1_i32 = arith.constant 1 : i32
    %0 = arith.addi %arg1, %c1_i32 : i32
    %c1_i32_0 = arith.constant 1 : i32
    %1 = arith.muli %0, %c1_i32_0 : i32
    %c0_i32 = arith.constant 0 : i32
    return %arg0, %1 : i32, i32
  }
  func.func @transform_2(%arg0: i32, %arg1: i32) -> (i32, i32) {
    %c0_i32 = arith.constant 0 : i32
    %c0_i32_0 = arith.constant 0 : i32
    %c0_i32_1 = arith.constant 0 : i32
    return %c0_i32, %c0_i32_0 : i32, i32
  }
  func.func @transform_3(%arg0: i32, %arg1: i32) -> (i32, i32) {
    %c0_i32 = arith.constant 0 : i32
    %c0_i32_0 = arith.constant 0 : i32
    %c0_i32_1 = arith.constant 0 : i32
    return %c0_i32, %c0_i32_0 : i32, i32
  }
  func.func @transform_4(%arg0: i32, %arg1: i32) -> (i32, i32) {
    %c0_i32 = arith.constant 0 : i32
    return %arg0, %arg1 : i32, i32
  }
}

</mosaic_0001>

<llo_original>
// kernel: _conv_band_call.1
$region0: #{_conv_band_call.1}
  #allocation0 [shape = 'u32[]', space=smem, size = 0x4, offset = 0x4, fixed_abs, tag = 'smem constant byte address 0x4 - core index']
  #allocation1 [shape = 'u32[144,128]{1,0:T(1,128)}', space=vmem, size = 0x12000, scoped, tag = 'internal scratch']
  %s0 = inlined_call_operand.vmem [shape: bf16[16,256], index: 0, kind: input, shape index: {}, may-alias: {0,1}]
  %s1 = inlined_call_operand.vmem [shape: bf16[16,256], index: 1, kind: input, shape index: {}, may-alias: {0,1}]
  %s2 = inlined_call_operand.hbm [shape: bf16[128,128], index: 2, kind: input, shape index: {}]
  %s3 = inlined_call_operand.hbm [shape: bf16[128,128], index: 3, kind: input, shape index: {}]
  %s4 = inlined_call_operand.vmem [shape: f32[16,128], index: 4, kind: output, shape index: {}]
  %s5 = sld [smem:[#allocation0]]
  $region116: #{_conv_band_call.1} parent=0
    _
  %s7 = ssub.s32 1, %s5
  %s8 = scalar_select 0, %s7, %s5
  $region1: #{_conv_band_call.1} parent=0
    #allocation2 [shape = 'u8[4096]{0}', space=vmem, size = 0x1000, scoped, tag = 'input window, operand 0, single buffered']
    #allocation3 [shape = 'u8[4096]{0}', space=vmem, size = 0x1000, scoped, tag = 'input window, operand 1, single buffered']
    #allocation4 [shape = 'u8[32768]{0}', space=vmem, size = 0x8000, scoped, tag = 'input window, operand 2, single buffered']
    #allocation5 [shape = 's32[1]{0}', space=sflag, size = 0x4, scoped, tag = 'scoped memory for _conv_band_call.1']
    #allocation6 [shape = 'u8[32768]{0}', space=vmem, size = 0x8000, scoped, tag = 'input window, operand 3, single buffered']
    #allocation7 [shape = 's32[1]{0}', space=sflag, size = 0x4, scoped, tag = 'scoped memory for _conv_band_call.1']
    %9 = vsyncpa [#allocation5], 0
    %10 = vsyncpa [#allocation7], 0
    // Predicated region
    $region2: #{_conv_band_call.1} parent=1 // pred_check
      _
    $region3: #{_conv_band_call.1} parent=1 // pred_check_branch
      %12 = sbr.rel (0) target = $region5
    $region4: #{_conv_band_call.1} parent=1 // pred_region
      // Predicated region
      $region6: #{_conv_band_call.1} parent=4 // pred_check
        _
      $region7: #{_conv_band_call.1} parent=4 // pred_check_branch
        %14 = sbr.rel (0) target = $region9
      $region8: #{_conv_band_call.1} parent=4 // pred_region
        // Predicated region
        $region10: #{_conv_band_call.1} parent=8 // pred_check
          _
        $region11: #{_conv_band_call.1} parent=8 // pred_check_branch
          %16 = sbr.rel target = $region13
        $region12: #{_conv_band_call.1} parent=8 // pred_region
          // Predicated region
          $region25: #{_conv_band_call.1} parent=12 // pred_check
            _
          $region26: #{_conv_band_call.1} parent=12 // pred_check_branch
            %34 = sbr.rel (0) target = $region28
          $region27: #{_conv_band_call.1} parent=12 // pred_region
            loop: start=0, step=1, limit=1
            $region29: #{_conv_band_call.1} parent=27 // loop_pre_header
              _
            $region30: #{_conv_band_call.1} parent=27 // loop_header
              %s36 = sphi 0, %s40
              %p37 = scmp.ge.s32.totalorder %s36, 1
              %s41 = sphi %s0, %s0
              %s42 = sphi [#allocation2], [#allocation2]
            $region31: #{_conv_band_call.1} parent=27 // loop_header_branch
              %39 = sbr.rel (%p37) target = $region35
            $region32: #{_conv_band_call.1} parent=27 // loop_body
              _
            $region33: #{_conv_band_call.1} parent=27 // loop_footer
              %s40 = sadd.s32 1, %s36
            $region34: #{_conv_band_call.1} parent=27 // loop_footer_branch
              %35 = sbr.rel target = $region30
            $region35: #{_conv_band_call.1} parent=27 // loop_exit
              _
            %s44 = ssub.s32 16, 1
            loop: start=0, step=1, limit=1
            $region36: #{_conv_band_call.1} parent=27 // loop_pre_header
              _
            $region37: #{_conv_band_call.1} parent=27 // loop_header
              %s46 = sphi 0, %s50
              %p47 = scmp.ge.s32.totalorder %s46, 1
              %s51 = sphi %s0, %s0
              %s52 = sphi [#allocation2], [#allocation2]
            $region38: #{_conv_band_call.1} parent=27 // loop_header_branch
              %49 = sbr.rel (%p47) target = $region42
            $region39: #{_conv_band_call.1} parent=27 // loop_body
              %v53 = vld [vmem:[%s51] sm:%s44]
              %54 = vst [vmem:[%s52] sm:%s44] %v53
              %v55 = vld [vmem:[%s51 + $0x8] sm:%s44]
              %56 = vst [vmem:[%s52 + $0x4] sm:%s44] %v55
            $region40: #{_conv_band_call.1} parent=27 // loop_footer
              %s50 = sadd.s32 1, %s46
            $region41: #{_conv_band_call.1} parent=27 // loop_footer_branch
              %45 = sbr.rel target = $region37
            $region42: #{_conv_band_call.1} parent=27 // loop_exit
              _
          $region28: #{_conv_band_call.1} parent=12 // pred_fallthru
            _
        $region13: #{_conv_band_call.1} parent=8 // pred_fallthru
          _
        // Predicated region
        $region14: #{_conv_band_call.1} parent=8 // pred_check
          _
        $region15: #{_conv_band_call.1} parent=8 // pred_check_branch
          %18 = sbr.rel (0) target = $region17
        $region16: #{_conv_band_call.1} parent=8 // pred_region
          %s20 = ssub.s32 16, 1
          loop: start=0, step=1, limit=1
          $region18: #{_conv_band_call.1} parent=16 // loop_pre_header
            _
          $region19: #{_conv_band_call.1} parent=16 // loop_header
            %s22 = sphi 0, %s26
            %p23 = scmp.ge.s32.totalorder %s22, 1
            %s27 = sphi %s0, %s0
            %s28 = sphi [#allocation2], [#allocation2]
          $region20: #{_conv_band_call.1} parent=16 // loop_header_branch
            %25 = sbr.rel (%p23) target = $region24
          $region21: #{_conv_band_call.1} parent=16 // loop_body
            %v29 = vld [vmem:[%s27] sm:%s20]
            %30 = vst [vmem:[%s28] sm:%s20] %v29
            %v31 = vld [vmem:[%s27 + $0x8] sm:%s20]
            %32 = vst [vmem:[%s28 + $0x4] sm:%s20] %v31
          $region22: #{_conv_band_call.1} parent=16 // loop_footer
            %s26 = sadd.s32 1, %s22
          $region23: #{_conv_band_call.1} parent=16 // loop_footer_branch
            %21 = sbr.rel target = $region19
          $region24: #{_conv_band_call.1} parent=16 // loop_exit
            _
        $region17: #{_conv_band_call.1} parent=8 // pred_fallthru
          _
      $region9: #{_conv_band_call.1} parent=4 // pred_fallthru
        _
      %57 = vnop
    $region5: #{_conv_band_call.1} parent=1 // pred_fallthru
      _
    // Predicated region
    $region43: #{_conv_band_call.1} parent=1 // pred_check
      _
    $region44: #{_conv_band_call.1} parent=1 // pred_check_branch
      %59 = sbr.rel (0) target = $region46
    $region45: #{_conv_band_call.1} parent=1 // pred_region
      %s60 = sadd.s32 0, 1
      %s61 = smul.addr %s60, 4
      %s62 = scalar_lea.vmem %s1, %s61
      // Predicated region
      $region47: #{_conv_band_call.1} parent=45 // pred_check
        _
      $region48: #{_conv_band_call.1} parent=45 // pred_check_branch
        %64 = sbr.rel (0) target = $region50
      $region49: #{_conv_band_call.1} parent=45 // pred_region
        // Predicated region
        $region51: #{_conv_band_call.1} parent=49 // pred_check
          _
        $region52: #{_conv_band_call.1} parent=49 // pred_check_branch
          %66 = sbr.rel target = $region54
        $region53: #{_conv_band_call.1} parent=49 // pred_region
          // Predicated region
          $region66: #{_conv_band_call.1} parent=53 // pred_check
            _
          $region67: #{_conv_band_call.1} parent=53 // pred_check_branch
            %84 = sbr.rel (0) target = $region69
          $region68: #{_conv_band_call.1} parent=53 // pred_region
            loop: start=0, step=1, limit=1
            $region70: #{_conv_band_call.1} parent=68 // loop_pre_header
              _
            $region71: #{_conv_band_call.1} parent=68 // loop_header
              %s86 = sphi 0, %s90
              %p87 = scmp.ge.s32.totalorder %s86, 1
              %s91 = sphi %s62, %s62
              %s92 = sphi [#allocation3], [#allocation3]
            $region72: #{_conv_band_call.1} parent=68 // loop_header_branch
              %89 = sbr.rel (%p87) target = $region76
            $region73: #{_conv_band_call.1} parent=68 // loop_body
              _
            $region74: #{_conv_band_call.1} parent=68 // loop_footer
              %s90 = sadd.s32 1, %s86
            $region75: #{_conv_band_call.1} parent=68 // loop_footer_branch
              %85 = sbr.rel target = $region71
            $region76: #{_conv_band_call.1} parent=68 // loop_exit
              _
            %s94 = ssub.s32 16, 1
            loop: start=0, step=1, limit=1
            $region77: #{_conv_band_call.1} parent=68 // loop_pre_header
              _
            $region78: #{_conv_band_call.1} parent=68 // loop_header
              %s96 = sphi 0, %s100
              %p97 = scmp.ge.s32.totalorder %s96, 1
              %s101 = sphi %s62, %s62
              %s102 = sphi [#allocation3], [#allocation3]
            $region79: #{_conv_band_call.1} parent=68 // loop_header_branch
              %99 = sbr.rel (%p97) target = $region83
            $region80: #{_conv_band_call.1} parent=68 // loop_body
              %v103 = vld [vmem:[%s101] sm:%s94]
              %104 = vst [vmem:[%s102] sm:%s94] %v103
              %v105 = vld [vmem:[%s101 + $0x8] sm:%s94]
              %106 = vst [vmem:[%s102 + $0x4] sm:%s94] %v105
            $region81: #{_conv_band_call.1} parent=68 // loop_footer
              %s100 = sadd.s32 1, %s96
            $region82: #{_conv_band_call.1} parent=68 // loop_footer_branch
              %95 = sbr.rel target = $region78
            $region83: #{_conv_band_call.1} parent=68 // loop_exit
              _
          $region69: #{_conv_band_call.1} parent=53 // pred_fallthru
            _
        $region54: #{_conv_band_call.1} parent=49 // pred_fallthru
          _
        // Predicated region
        $region55: #{_conv_band_call.1} parent=49 // pred_check
          _
        $region56: #{_conv_band_call.1} parent=49 // pred_check_branch
          %68 = sbr.rel (0) target = $region58
        $region57: #{_conv_band_call.1} parent=49 // pred_region
          %s70 = ssub.s32 16, 1
          loop: start=0, step=1, limit=1
          $region59: #{_conv_band_call.1} parent=57 // loop_pre_header
            _
          $region60: #{_conv_band_call.1} parent=57 // loop_header
            %s72 = sphi 0, %s76
            %p73 = scmp.ge.s32.totalorder %s72, 1
            %s77 = sphi %s62, %s62
            %s78 = sphi [#allocation3], [#allocation3]
          $region61: #{_conv_band_call.1} parent=57 // loop_header_branch
            %75 = sbr.rel (%p73) target = $region65
          $region62: #{_conv_band_call.1} parent=57 // loop_body
            %v79 = vld [vmem:[%s77] sm:%s70]
            %80 = vst [vmem:[%s78] sm:%s70] %v79
            %v81 = vld [vmem:[%s77 + $0x8] sm:%s70]
            %82 = vst [vmem:[%s78 + $0x4] sm:%s70] %v81
          $region63: #{_conv_band_call.1} parent=57 // loop_footer
            %s76 = sadd.s32 1, %s72
          $region64: #{_conv_band_call.1} parent=57 // loop_footer_branch
            %71 = sbr.rel target = $region60
          $region65: #{_conv_band_call.1} parent=57 // loop_exit
            _
        $region58: #{_conv_band_call.1} parent=49 // pred_fallthru
          _
      $region50: #{_conv_band_call.1} parent=45 // pred_fallthru
        _
      %107 = vnop
    $region46: #{_conv_band_call.1} parent=1 // pred_fallthru
      _
    // Predicated region
    $region84: #{_conv_band_call.1} parent=1 // pred_check
      _
    $region85: #{_conv_band_call.1} parent=1 // pred_check_branch
      %109 = sbr.rel (0) target = $region87
    $region86: #{_conv_band_call.1} parent=1 // pred_region
      %s111 = ssub.s32 1024, 1024
      %112 = vsyncadd [#allocation5], %s111
      %s113 = sshll.u32 [#allocation4], 4
      %s114 = int_to_ptr.vmem [resolvable:$true] %s113
      %119 = dma.hbm_to_vmem [thread:$0]  %s2, 1024, %s114, [#allocation5], 64, 64, 4
    $region87: #{_conv_band_call.1} parent=1 // pred_fallthru
      _
    // Predicated region
    $region88: #{_conv_band_call.1} parent=1 // pred_check
      _
    $region89: #{_conv_band_call.1} parent=1 // pred_check_branch
      %121 = sbr.rel (0) target = $region91
    $region90: #{_conv_band_call.1} parent=1 // pred_region
      %s123 = ssub.s32 1024, 1024
      %124 = vsyncadd [#allocation7], %s123
      %s125 = sshll.u32 [#allocation6], 4
      %s126 = int_to_ptr.vmem [resolvable:$true] %s125
      %131 = dma.hbm_to_vmem [thread:$0]  %s3, 1024, %s126, [#allocation7], 64, 64, 4
    $region91: #{_conv_band_call.1} parent=1 // pred_fallthru
      _
    // Predicated region
    $region92: #{_conv_band_call.1} parent=1 // pred_check
      _
    $region93: #{_conv_band_call.1} parent=1 // pred_check_branch
      %133 = sbr.rel (0) target = $region95
    $region94: #{_conv_band_call.1} parent=1 // pred_region
      _
    $region95: #{_conv_band_call.1} parent=1 // pred_fallthru
      _
    // Predicated region
    $region96: #{_conv_band_call.1} parent=1 // pred_check
      _
    $region97: #{_conv_band_call.1} parent=1 // pred_check_branch
      %135 = sbr.rel (0) target = $region99
    $region98: #{_conv_band_call.1} parent=1 // pred_region
      _
    $region99: #{_conv_band_call.1} parent=1 // pred_fallthru
      _
    // Predicated region
    $region100: #{_conv_band_call.1} parent=1 // pred_check
      _
    $region101: #{_conv_band_call.1} parent=1 // pred_check_branch
      %137 = sbr.rel (0) target = $region103
    $region102: #{_conv_band_call.1} parent=1 // pred_region
      %138 = dma.done [#allocation5], 1024
    $region103: #{_conv_band_call.1} parent=1 // pred_fallthru
      _
    // Predicated region
    $region104: #{_conv_band_call.1} parent=1 // pred_check
      _
    $region105: #{_conv_band_call.1} parent=1 // pred_check_branch
      %140 = sbr.rel (0) target = $region107
    $region106: #{_conv_band_call.1} parent=1 // pred_region
      %141 = dma.done [#allocation7], 1024
    $region107: #{_conv_band_call.1} parent=1 // pred_fallthru
      _
    %s142 = sadd.s32 0, 1
    %v144 = vld [vmem:[#allocation2] sm:$0xf]
    %v145 = vld [vmem:[#allocation2 + $0x4] sm:$0xf]
    %v146 = vld [vmem:[#allocation4] sm:$0xf]
    %v147 = vld [vmem:[#allocation4 + $0x4] sm:$0xf]
    %v148 = vld [vmem:[#allocation4 + $0x8] sm:$0xf]
    %v149 = vld [vmem:[#allocation4 + $0xc] sm:$0xf]
    %v150 = vld [vmem:[#allocation4 + $0x10] sm:$0xf]
    %v151 = vld [vmem:[#allocation4 + $0x14] sm:$0xf]
    %v152 = vld [vmem:[#allocation4 + $0x18] sm:$0xf]
    %v153 = vld [vmem:[#allocation4 + $0x1c] sm:$0xf]
    %v154 = vld [vmem:[#allocation4 + $0x20] sm:$0xf]
    %v155 = vld [vmem:[#allocation4 + $0x24] sm:$0xf]
    %v156 = vld [vmem:[#allocation4 + $0x28] sm:$0xf]
    %v157 = vld [vmem:[#allocation4 + $0x2c] sm:$0xf]
    %v158 = vld [vmem:[#allocation4 + $0x30] sm:$0xf]
    %v159 = vld [vmem:[#allocation4 + $0x34] sm:$0xf]
    %v160 = vld [vmem:[#allocation4 + $0x38] sm:$0xf]
    %v161 = vld [vmem:[#allocation4 + $0x3c] sm:$0xf]
    %v162 = vld [vmem:[#allocation3] sm:$0xf]
    %v163 = vld [vmem:[#allocation3 + $0x4] sm:$0xf]
    %v164 = vld [vmem:[#allocation6] sm:$0xf]
    %v165 = vld [vmem:[#allocation6 + $0x4] sm:$0xf]
    %v166 = vld [vmem:[#allocation6 + $0x8] sm:$0xf]
    %v167 = vld [vmem:[#allocation6 + $0xc] sm:$0xf]
    %v168 = vld [vmem:[#allocation6 + $0x10] sm:$0xf]
    %v169 = vld [vmem:[#allocation6 + $0x14] sm:$0xf]
    %v170 = vld [vmem:[#allocation6 + $0x18] sm:$0xf]
    %v171 = vld [vmem:[#allocation6 + $0x1c] sm:$0xf]
    %v172 = vld [vmem:[#allocation6 + $0x20] sm:$0xf]
    %v173 = vld [vmem:[#allocation6 + $0x24] sm:$0xf]
    %v174 = vld [vmem:[#allocation6 + $0x28] sm:$0xf]
    %v175 = vld [vmem:[#allocation6 + $0x2c] sm:$0xf]
    %v176 = vld [vmem:[#allocation6 + $0x30] sm:$0xf]
    %v177 = vld [vmem:[#allocation6 + $0x34] sm:$0xf]
    %v178 = vld [vmem:[#allocation6 + $0x38] sm:$0xf]
    %v179 = vld [vmem:[#allocation6 + $0x3c] sm:$0xf]
    %v182 = vunpack.c.l.b16 %v162
    %v183 = vunpack.c.l.b16 %v163
    %v184 = vpack.c.b16 %v183, %v182
    %v202 = vunpack.c.l.b16 %v164
    %v203 = vunpack.c.l.b16 %v165
    %v204 = vunpack.c.l.b16 %v166
    %v205 = vunpack.c.l.b16 %v167
    %v206 = vunpack.c.l.b16 %v168
    %v207 = vunpack.c.l.b16 %v169
    %v208 = vunpack.c.l.b16 %v170
    %v209 = vunpack.c.l.b16 %v171
    %v210 = vunpack.c.l.b16 %v172
    %v211 = vunpack.c.l.b16 %v173
    %v212 = vunpack.c.l.b16 %v174
    %v213 = vunpack.c.l.b16 %v175
    %v214 = vunpack.c.l.b16 %v176
    %v215 = vunpack.c.l.b16 %v177
    %v216 = vunpack.c.l.b16 %v178
    %v217 = vunpack.c.l.b16 %v179
    %v218 = vpack.c.b16 %v203, %v202
    %v219 = vpack.c.b16 %v205, %v204
    %v220 = vpack.c.b16 %v207, %v206
    %v221 = vpack.c.b16 %v209, %v208
    %v222 = vpack.c.b16 %v211, %v210
    %v223 = vpack.c.b16 %v213, %v212
    %v224 = vpack.c.b16 %v215, %v214
    %v225 = vpack.c.b16 %v217, %v216
    %234 = vmatprep.subr.bf16.mxu0 0
    %235 = vmatpush1.bf16.msra.mxu0 %v225
    %236 = vmatprep.subr.bf16.mxu0 0
    %237 = vmatpush1.bf16.msra.mxu0 %v224
    %238 = vmatprep.subr.bf16.mxu0 0
    %239 = vmatpush1.bf16.msra.mxu0 %v223
    %240 = vmatprep.subr.bf16.mxu0 0
    %241 = vmatpush1.bf16.msra.mxu0 %v222
    %242 = vmatprep.subr.bf16.mxu0 0
    %243 = vmatpush1.bf16.msra.mxu0 %v221
    %244 = vmatprep.subr.bf16.mxu0 0
    %245 = vmatpush1.bf16.msra.mxu0 %v220
    %246 = vmatprep.subr.bf16.mxu0 0
    %247 = vmatpush1.bf16.msra.mxu0 %v219
    %248 = vmatprep.subr.bf16.mxu0 0
    %249 = vmatpush1.bf16.msra.mxu0 %v218
    %250 = vmatprep.subr.bf16.mxu0 0
    %251 = vmatpush2.bf16.msra.mxu0 0
    %252 = vmatprep.subr.bf16.mxu0 0
    %253 = vmatpush2.bf16.msra.mxu0 0
    %254 = vmatprep.subr.bf16.mxu0 0
    %255 = vmatpush2.bf16.msra.mxu0 0
    %256 = vmatprep.subr.bf16.mxu0 0
    %257 = vmatpush2.bf16.msra.mxu0 0
    %258 = vmatprep.subr.bf16.mxu0 0
    %259 = vmatpush2.bf16.msra.mxu0 0
    %260 = vmatprep.subr.bf16.mxu0 0
    %261 = vmatpush2.bf16.msra.mxu0 0
    %262 = vmatprep.subr.bf16.mxu0 0
    %263 = vmatpush2.bf16.msra.mxu0 0
    %264 = vmatprep.subr.bf16.mxu0 0
    %265 = vmatpush2.bf16.msra.mxu0 0
    %266 = vmatprep.mubr.bf16.mxu0 0
    %267 = vmatmul.mubr.bf16.gmra.mxu0 %v184
    %v268 = vpop.f32.mrf.mxu0
    %v269 = vadd.f32 0.0, %v268
    %v270 = vpop.f32.mrf.mxu0
    %v271 = vpop.f32.mrf.mxu0
    %v272 = vadd.f32 0.0, %v271
    %v273 = vpop.f32.mrf.mxu0
    %274 = vdwg.mxu0
    %v277 = vunpack.c.l.b16 %v144
    %v278 = vunpack.c.l.b16 %v145
    %v279 = vpack.c.b16 %v278, %v277
    %v297 = vunpack.c.l.b16 %v146
    %v298 = vunpack.c.l.b16 %v147
    %v299 = vunpack.c.l.b16 %v148
    %v300 = vunpack.c.l.b16 %v149
    %v301 = vunpack.c.l.b16 %v150
    %v302 = vunpack.c.l.b16 %v151
    %v303 = vunpack.c.l.b16 %v152
    %v304 = vunpack.c.l.b16 %v153
    %v305 = vunpack.c.l.b16 %v154
    %v306 = vunpack.c.l.b16 %v155
    %v307 = vunpack.c.l.b16 %v156
    %v308 = vunpack.c.l.b16 %v157
    %v309 = vunpack.c.l.b16 %v158
    %v310 = vunpack.c.l.b16 %v159
    %v311 = vunpack.c.l.b16 %v160
    %v312 = vunpack.c.l.b16 %v161
    %v313 = vpack.c.b16 %v298, %v297
    %v314 = vpack.c.b16 %v300, %v299
    %v315 = vpack.c.b16 %v302, %v301
    %v316 = vpack.c.b16 %v304, %v303
    %v317 = vpack.c.b16 %v306, %v305
    %v318 = vpack.c.b16 %v308, %v307
    %v319 = vpack.c.b16 %v310, %v309
    %v320 = vpack.c.b16 %v312, %v311
    %329 = vmatprep.subr.bf16.mxu0 0
    %330 = vmatpush1.bf16.msra.mxu0 %v320
    %331 = vmatprep.subr.bf16.mxu0 0
    %332 = vmatpush1.bf16.msra.mxu0 %v319
    %333 = vmatprep.subr.bf16.mxu0 0
    %334 = vmatpush1.bf16.msra.mxu0 %v318
    %335 = vmatprep.subr.bf16.mxu0 0
    %336 = vmatpush1.bf16.msra.mxu0 %v317
    %337 = vmatprep.subr.bf16.mxu0 0
    %338 = vmatpush1.bf16.msra.mxu0 %v316
    %339 = vmatprep.subr.bf16.mxu0 0
    %340 = vmatpush1.bf16.msra.mxu0 %v315
    %341 = vmatprep.subr.bf16.mxu0 0
    %342 = vmatpush1.bf16.msra.mxu0 %v314
    %343 = vmatprep.subr.bf16.mxu0 0
    %344 = vmatpush1.bf16.msra.mxu0 %v313
    %345 = vmatprep.subr.bf16.mxu0 0
    %346 = vmatpush2.bf16.msra.mxu0 0
    %347 = vmatprep.subr.bf16.mxu0 0
    %348 = vmatpush2.bf16.msra.mxu0 0
    %349 = vmatprep.subr.bf16.mxu0 0
    %350 = vmatpush2.bf16.msra.mxu0 0
    %351 = vmatprep.subr.bf16.mxu0 0
    %352 = vmatpush2.bf16.msra.mxu0 0
    %353 = vmatprep.subr.bf16.mxu0 0
    %354 = vmatpush2.bf16.msra.mxu0 0
    %355 = vmatprep.subr.bf16.mxu0 0
    %356 = vmatpush2.bf16.msra.mxu0 0
    %357 = vmatprep.subr.bf16.mxu0 0
    %358 = vmatpush2.bf16.msra.mxu0 0
    %359 = vmatprep.subr.bf16.mxu0 0
    %360 = vmatpush2.bf16.msra.mxu0 0
    %361 = vmatprep.mubr.bf16.mxu0 0
    %362 = vmatmul.mubr.bf16.gmra.mxu0 %v279
    %v363 = vpop.f32.mrf.mxu0
    %v364 = vadd.f32 %v269, %v363
    %v365 = vpop.f32.mrf.mxu0
    %v366 = vpop.f32.mrf.mxu0
    %v367 = vadd.f32 %v272, %v366
    %v368 = vpop.f32.mrf.mxu0
    %369 = vdwg.mxu0
    %370 = vst [vmem:[%s4] sm:$0xff] %v364
    %371 = vst [vmem:[%s4 + $0x8] sm:$0xff] %v367
    // Predicated region
    $region108: #{_conv_band_call.1} parent=1 // pred_check
      _
    $region109: #{_conv_band_call.1} parent=1 // pred_check_branch
      %373 = sbr.rel (0) target = $region111
    $region110: #{_conv_band_call.1} parent=1 // pred_region
      _
    $region111: #{_conv_band_call.1} parent=1 // pred_fallthru
      _
    // Predicated region
    $region112: #{_conv_band_call.1} parent=1 // pred_check
      _
    $region113: #{_conv_band_call.1} parent=1 // pred_check_branch
      %375 = sbr.rel (0) target = $region115
    $region114: #{_conv_band_call.1} parent=1 // pred_region
      _
    $region115: #{_conv_band_call.1} parent=1 // pred_fallthru
      _
    %376 = vsyncpa [#allocation5], 1
    %377 = vsyncpa [#allocation7], 1

</llo_original>
